<compile_context>
chip_gen: v5e
topology: v5e:2x2
jax: 0.10.0
libtpu: 0.0.40
codegen_flags: <defaults>
</compile_context>

<pallas_src>
import functools

import jax
import jax.numpy as jnp
import numpy as np
from jax.experimental import pallas as pl
from jax.experimental.pallas import tpu as pltpu


_VMEM_LIMIT_BYTES = 48 * 1024 * 1024  # below v7x's 64 MiB physical VMEM


def _pick_tile(dim, targets):
    """Largest candidate tile that evenly divides `dim`; else the full dim."""
    for t in targets:
        if dim >= t and dim % t == 0:
            return t
    return dim


# --------------------------- tiled matmul kernels ---------------------------


def _matmul_kernel(x_ref, w_ref, o_ref, acc_ref):
    @pl.when(pl.program_id(2) == 0)
    def _():
        acc_ref[...] = jnp.zeros_like(acc_ref)

    acc_ref[...] += jnp.dot(x_ref[...], w_ref[...],
                            preferred_element_type=jnp.float32)

    @pl.when(pl.program_id(2) == pl.num_programs(2) - 1)
    def _():
        o_ref[...] = acc_ref[...].astype(o_ref.dtype)


def _matmul_bias_kernel(x_ref, w_ref, b_ref, o_ref, acc_ref):
    @pl.when(pl.program_id(2) == 0)
    def _():
        acc_ref[...] = jnp.zeros_like(acc_ref)

    acc_ref[...] += jnp.dot(x_ref[...], w_ref[...],
                            preferred_element_type=jnp.float32)

    @pl.when(pl.program_id(2) == pl.num_programs(2) - 1)
    def _():
        o_ref[...] = (acc_ref[...] + b_ref[...].astype(jnp.float32)
                      ).astype(o_ref.dtype)


def tiled_matmul(x, w, b=None, *, tm_target=256, tn_target=256, tk_target=512):
    """x:[M,K] @ w:[K,N] (+ b:[1,N]) with a (M,N,K)-tiled grid and f32 accum."""
    M, K = x.shape
    _, N = w.shape
    tm = _pick_tile(M, (tm_target, 128))
    tn = _pick_tile(N, (tn_target, 128))
    tk = _pick_tile(K, (tk_target, 256, 128))
    grid = (M // tm, N // tn, K // tk)

    in_specs = [
        pl.BlockSpec((tm, tk), lambda i, j, k: (i, k)),
        pl.BlockSpec((tk, tn), lambda i, j, k: (k, j)),
    ]
    args = [x, w]
    if b is not None:
        in_specs.append(pl.BlockSpec((1, tn), lambda i, j, k: (0, j)))
        args.append(b)
        kernel = _matmul_bias_kernel
    else:
        kernel = _matmul_kernel

    return pl.pallas_call(
        kernel,
        out_shape=jax.ShapeDtypeStruct((M, N), x.dtype),
        grid_spec=pltpu.PrefetchScalarGridSpec(
            num_scalar_prefetch=0,
            grid=grid,
            in_specs=in_specs,
            out_specs=pl.BlockSpec((tm, tn), lambda i, j, k: (i, j)),
            scratch_shapes=[pltpu.VMEM((tm, tn), jnp.float32)],
        ),
        compiler_params=pltpu.CompilerParams(
            dimension_semantics=("parallel", "parallel", "arbitrary"),
            vmem_limit_bytes=_VMEM_LIMIT_BYTES,
        ),
    )(*args)


# ----------------- fused RMSNorm + RoPE + causal flash GQA -------------------


def _flash_attn_kernel(
    q_ref, k_ref, v_ref, cosq_ref, sinq_ref, cosk_ref, sink_ref, qw_ref, kw_ref,
    o_ref,
    qrot_ref, acc_ref, m_ref, l_ref,
    *, num_heads, num_kv_heads, head_dim, eps, scale, tq, tkv,
):
    # q_ref/o_ref: (tq, num_heads*D)   k_ref/v_ref: (tkv, num_kv_heads*D)
    # cos/sin: (tq|tkv, D)   qw/kw: (1, D)
    # scratch: qrot/acc (H, tq, D) f32, m/l (H, tq, 1) f32
    qi = pl.program_id(0)
    ki = pl.program_id(1)
    nk = pl.num_programs(1)
    D = head_dim
    half = D // 2
    group = num_heads // num_kv_heads
    cdt = q_ref.dtype  # MXU operand dtype (bf16 in production, f32 in the test)

    def rms_norm(x, w):
        var = jnp.mean(x * x, axis=-1, keepdims=True)
        return x * jax.lax.rsqrt(var + eps) * w

    def rope(x, cos_full, sin_signed):
        # NeoX rotary: x * cos + rotate_half(x) * sin_signed,
        # with sin_signed = [-sin, sin] so signs are baked into the table.
        if D % 128 == 0:
            # lane-aligned rotate -> XLU slot, free next to the MXU work
            xr = pltpu.roll(x, shift=half, axis=-1)
        else:
            # tiny head_dim fallback (test shapes)
            xr = jnp.concatenate([x[:, half:], x[:, :half]], axis=-1)
        return x * cos_full + xr * sin_signed

    # ---- init (once per q block): zero stats, norm + rope + pre-scale q ----
    @pl.when(ki == 0)
    def _init():
        m_ref[...] = jnp.full_like(m_ref, -1e30)
        l_ref[...] = jnp.zeros_like(l_ref)
        acc_ref[...] = jnp.zeros_like(acc_ref)
        cos_q = cosq_ref[...].astype(jnp.float32)
        sin_q = sinq_ref[...].astype(jnp.float32)
        qw = qw_ref[...].astype(jnp.float32)
        for h in range(num_heads):  # static lane slices of the [T, H*D] layout
            qh = q_ref[:, h * D:(h + 1) * D].astype(jnp.float32)
            qh = rms_norm(qh, qw)
            qrot_ref[h] = rope(qh, cos_q, sin_q) * scale

    # ---- causal block skip: only lower-triangular KV blocks do work ----
    @pl.when(ki <= qi)  # tq == tkv, so ki <= qi <=> block intersects causal region
    def _compute():
        cos_k = cosk_ref[...].astype(jnp.float32)
        sin_k = sink_ref[...].astype(jnp.float32)
        kw = kw_ref[...].astype(jnp.float32)
        # one mask per grid step, shared by every head in the block
        row = qi * tq + jax.lax.broadcasted_iota(jnp.int32, (tq, tkv), 0)
        col = ki * tkv + jax.lax.broadcasted_iota(jnp.int32, (tq, tkv), 1)
        mask = row >= col
        neg = jnp.float32(-1e30)

        for g in range(num_kv_heads):
            # K norm + rope computed once per KV head, reused by its q-group
            kg = k_ref[:, g * D:(g + 1) * D].astype(jnp.float32)
            kg = rope(rms_norm(kg, kw), cos_k, sin_k).astype(cdt)
            vg = v_ref[:, g * D:(g + 1) * D]

            for hq in range(group):
                h = g * group + hq
                qh = qrot_ref[h].astype(cdt)
                # (tq, D) x (tkv, D) contracting D  ->  (tq, tkv)
                s = jax.lax.dot_general(
                    qh, kg, (((1,), (1,)), ((), ())),
                    preferred_element_type=jnp.float32)
                s = jnp.where(mask, s, neg)

                m_prev = m_ref[h]
                m_new = jnp.maximum(m_prev, jnp.max(s, axis=-1, keepdims=True))
                alpha = jnp.exp(m_prev - m_new)
                p = jnp.exp(s - m_new)
                l_ref[h] = alpha * l_ref[h] + jnp.sum(p, axis=-1, keepdims=True)
                acc_ref[h] = alpha * acc_ref[h] + jnp.dot(
                    p.astype(cdt), vg, preferred_element_type=jnp.float32)
                m_ref[h] = m_new

    # ---- finalize (once per q block): normalize, lane-dense store ----
    @pl.when(ki == nk - 1)
    def _finalize():
        for h in range(num_heads):
            # exact reciprocal: runs once per output tile (off the hot path),
            # keeps the tight numerical tolerance of the reference.
            inv = pl.reciprocal(l_ref[h], approx=False)
            o_ref[:, h * D:(h + 1) * D] = (acc_ref[h] * inv).astype(o_ref.dtype)


def fused_norm_rope_flash_attention(
    q, k, v, cos_t, sin_t, q_norm_w, k_norm_w, *,
    num_heads, num_kv_heads, head_dim, eps, scale, seq_tile_target=256,
):
    # q: [T, num_heads*D], k/v: [T, num_kv_heads*D], cos/sin: [T, D], norms: [1, D]
    T = q.shape[0]
    D = head_dim
    tS = _pick_tile(T, (seq_tile_target, 128))  # tq == tkv (simplifies causal skip)
    nblk = T // tS

    kernel = functools.partial(
        _flash_attn_kernel,
        num_heads=num_heads, num_kv_heads=num_kv_heads, head_dim=D,
        eps=eps, scale=scale, tq=tS, tkv=tS)

    grid_spec = pltpu.PrefetchScalarGridSpec(
        num_scalar_prefetch=0,
        grid=(nblk, nblk),  # (q blocks, kv blocks); kv is the reduction axis
        in_specs=[
            pl.BlockSpec((tS, num_heads * D), lambda qi, ki: (qi, 0)),      # q
            pl.BlockSpec((tS, num_kv_heads * D), lambda qi, ki: (ki, 0)),   # k
            pl.BlockSpec((tS, num_kv_heads * D), lambda qi, ki: (ki, 0)),   # v
            pl.BlockSpec((tS, D), lambda qi, ki: (qi, 0)),                  # cos @ q rows
            pl.BlockSpec((tS, D), lambda qi, ki: (qi, 0)),                  # sin @ q rows
            pl.BlockSpec((tS, D), lambda qi, ki: (ki, 0)),                  # cos @ k rows
            pl.BlockSpec((tS, D), lambda qi, ki: (ki, 0)),                  # sin @ k rows
            pl.BlockSpec((1, D), lambda qi, ki: (0, 0)),                    # q_norm_w
            pl.BlockSpec((1, D), lambda qi, ki: (0, 0)),                    # k_norm_w
        ],
        out_specs=pl.BlockSpec((tS, num_heads * D), lambda qi, ki: (qi, 0)),
        scratch_shapes=[
            pltpu.VMEM((num_heads, tS, D), jnp.float32),  # normed+roped+scaled q
            pltpu.VMEM((num_heads, tS, D), jnp.float32),  # output accumulator
            pltpu.VMEM((num_heads, tS, 1), jnp.float32),  # running max
            pltpu.VMEM((num_heads, tS, 1), jnp.float32),  # running denominator
        ],
    )

    return pl.pallas_call(
        kernel,
        grid_spec=grid_spec,
        out_shape=jax.ShapeDtypeStruct((T, num_heads * D), q.dtype),
        compiler_params=pltpu.CompilerParams(
            dimension_semantics=("parallel", "arbitrary"),
            vmem_limit_bytes=_VMEM_LIMIT_BYTES,
        ),
    )(q, k, v, cos_t, sin_t, cos_t, sin_t, q_norm_w, k_norm_w)


# ------------------------------- forward pass --------------------------------


def dots1_attention_forward(positions, hidden_states, params, cfg):
    """Pallas for the hot paths; only cheap XLA glue in between (no transposes)."""
    T, _ = hidden_states.shape
    nh, nkv, D = cfg["num_heads"], cfg["num_kv_heads"], cfg["head_dim"]
    q_size, kv_size = nh * D, nkv * D

    # 1) fused QKV projection (tiled Pallas matmul + bias)
    qkv = tiled_matmul(hidden_states, params["w_qkv"], params["b_qkv"])
    q = qkv[:, :q_size]                      # [T, nh*D]  token-major, no transpose
    k = qkv[:, q_size:q_size + kv_size]      # [T, nkv*D]
    v = qkv[:, q_size + kv_size:]            # [T, nkv*D]

    # rotary tables (full-D, lane-dense; sign pattern baked into the sin table)
    half = D // 2
    inv_freq = 1.0 / (cfg["rope_theta"] **
                      (jnp.arange(half, dtype=jnp.float32) * 2.0 / D))
    freqs = positions.astype(jnp.float32)[:, None] * inv_freq[None, :]
    cos_t = jnp.concatenate([jnp.cos(freqs), jnp.cos(freqs)], axis=-1)   # [T, D]
    sin_t = jnp.concatenate([-jnp.sin(freqs), jnp.sin(freqs)], axis=-1)  # [T, D]

    # 2) fused RMSNorm + RoPE + causal flash GQA attention (Pallas), out [T, nh*D]
    attn = fused_norm_rope_flash_attention(
        q, k, v, cos_t, sin_t, params["q_norm_w"], params["k_norm_w"],
        num_heads=nh, num_kv_heads=nkv, head_dim=D,
        eps=cfg["rms_norm_eps"], scale=D ** -0.5)

    # 3) output projection (tiled Pallas matmul, no bias)
    return tiled_matmul(attn, params["w_o"])


# -------------------------------- reference -----------------------------------


def reference_forward(positions, hidden_states, params, cfg):
    T, _ = hidden_states.shape
    nh, nkv, D = cfg["num_heads"], cfg["num_kv_heads"], cfg["head_dim"]
    eps, scale = cfg["rms_norm_eps"], D ** -0.5
    q_size, kv_size = nh * D, nkv * D

    qkv = hidden_states @ params["w_qkv"] + params["b_qkv"][0]
    q, k, v = jnp.split(qkv, [q_size, q_size + kv_size], axis=-1)

    def rms(x, w):
        var = jnp.mean(x * x, axis=-1, keepdims=True)
        return x * jax.lax.rsqrt(var + eps) * w

    q = rms(q.reshape(T, nh, D), params["q_norm_w"][0])
    k = rms(k.reshape(T, nkv, D), params["k_norm_w"][0])
    v = v.reshape(T, nkv, D)

    half = D // 2
    inv_freq = 1.0 / (cfg["rope_theta"] **
                      (jnp.arange(half, dtype=jnp.float32) * 2.0 / D))
    freqs = positions.astype(jnp.float32)[:, None] * inv_freq[None, :]
    cos, sin = jnp.cos(freqs)[:, None, :], jnp.sin(freqs)[:, None, :]

    def rope(x):
        x1, x2 = x[..., :half], x[..., half:]
        return jnp.concatenate([x1 * cos - x2 * sin, x2 * cos + x1 * sin], axis=-1)

    q, k = rope(q), rope(k)

    group = nh // nkv
    k = jnp.repeat(k, group, axis=1)
    v = jnp.repeat(v, group, axis=1)

    s = jnp.einsum("qhd,khd->hqk", q, k) * scale
    mask = jnp.tril(jnp.ones((T, T), dtype=bool))
    s = jnp.where(mask[None], s, -1e30)
    p = jax.nn.softmax(s, axis=-1)
    o = jnp.einsum("hqk,khd->qhd", p, v).reshape(T, nh * D)
    return o @ params["w_o"]


# ---------------------------------- main ---------------------------------------


if __name__ == "__main__":
    cfg = dict(
        hidden_size=32,
        num_heads=4,
        num_kv_heads=2,
        head_dim=8,          # hidden_size // num_heads
        rope_theta=10000.0,
        rms_norm_eps=1e-6,
    )
    T = 8
    H = cfg["hidden_size"]
    nh, nkv, D = cfg["num_heads"], cfg["num_kv_heads"], cfg["head_dim"]
    qkv_dim = (nh + 2 * nkv) * D

    key = jax.random.PRNGKey(0)
    k0, k1, k2, k3, k4, k5 = jax.random.split(key, 6)

    params = {
        "w_qkv": jax.random.normal(k0, (H, qkv_dim), jnp.float32) * (1.0 / np.sqrt(H)),
        "b_qkv": jax.random.normal(k1, (1, qkv_dim), jnp.float32) * 0.02,
        "w_o": jax.random.normal(k2, (nh * D, H), jnp.float32) * (1.0 / np.sqrt(nh * D)),
        "q_norm_w": 1.0 + 0.05 * jax.random.normal(k3, (1, D), jnp.float32),
        "k_norm_w": 1.0 + 0.05 * jax.random.normal(k4, (1, D), jnp.float32),
    }

    hidden_states = jax.random.normal(k5, (T, H), jnp.float32)
    positions = jnp.arange(T, dtype=jnp.int32)

    out = dots1_attention_forward(positions, hidden_states, params, cfg)
    out = jax.block_until_ready(out)

    ref = jax.block_until_ready(reference_forward(positions, hidden_states, params, cfg))
    np.testing.assert_allclose(np.asarray(out), np.asarray(ref), rtol=1e-3, atol=1e-3)

    print("KERNEL_OK")
</pallas_src>

<mosaic_0001>
module attributes {stable_mosaic.version = 11 : i64} {
  func.func @_matmul_bias_kernel(%arg0: i32, %arg1: i32, %arg2: i32, %arg3: memref<8x32xf32, #tpu.memory_space<vmem>>, %arg4: memref<32x64xf32, #tpu.memory_space<vmem>>, %arg5: memref<1x64xf32, #tpu.memory_space<vmem>>, %arg6: memref<8x64xf32, #tpu.memory_space<vmem>>, %arg7: memref<8x64xf32, #tpu.memory_space<vmem>>) attributes {dimension_semantics = [#tpu.dimension_semantics<parallel>, #tpu.dimension_semantics<parallel>, #tpu.dimension_semantics<arbitrary>], iteration_bounds = array<i64: 1, 1, 1>, scalar_prefetch = 0 : i64, scratch_operands = 1 : i64, tpu.core_type = #tpu.core_type<tc>, window_params = [{transform_indices = @transform_0, window_bounds = array<i64: 8, 32>}, {transform_indices = @transform_1, window_bounds = array<i64: 32, 64>}, {transform_indices = @transform_2, window_bounds = array<i64: 1, 64>}, {transform_indices = @transform_3, window_bounds = array<i64: 8, 64>}]} {
    %c0_i32 = arith.constant 0 : i32
    %0 = arith.cmpi eq, %arg2, %c0_i32 : i32
    %1 = arith.extui %0 : i1 to i32
    %c0_i32_0 = arith.constant 0 : i32
    %2 = arith.cmpi ne, %1, %c0_i32_0 : i32
    scf.if %2 {
      %cst_10 = arith.constant 0.000000e+00 : f32
      %12 = vector.broadcast %cst_10 : f32 to vector<8x64xf32>
      %c0_11 = arith.constant 0 : index
      %c0_12 = arith.constant 0 : index
      %13 = vector.load %arg7[%c0_11, %c0_12] : memref<8x64xf32, #tpu.memory_space<vmem>>, vector<8x64xf32>
      tpu.vector_store %arg7[%c0_11, %c0_12], %12 {strides = array<i32>} : memref<8x64xf32, #tpu.memory_space<vmem>>, vector<8x64xf32>,
    } else {
    }
    %c0 = arith.constant 0 : index
    %c0_1 = arith.constant 0 : index
    %3 = vector.load %arg7[%c0, %c0_1] : memref<8x64xf32, #tpu.memory_space<vmem>>, vector<8x64xf32>
    %c0_2 = arith.constant 0 : index
    %c0_3 = arith.constant 0 : index
    %4 = vector.load %arg3[%c0_2, %c0_3] : memref<8x32xf32, #tpu.memory_space<vmem>>, vector<8x32xf32>
    %c0_4 = arith.constant 0 : index
    %c0_5 = arith.constant 0 : index
    %5 = vector.load %arg4[%c0_4, %c0_5] : memref<32x64xf32, #tpu.memory_space<vmem>>, vector<32x64xf32>
    %cst = arith.constant dense<0.000000e+00> : vector<8x64xf32>
    %6 = tpu.matmul %4, %5, %cst {dimension_numbers = #tpu.dot_dimension_numbers<[1], [0], [0], [1], [0, 0, 1, 1], [], []>} : vector<8x32xf32>, vector<32x64xf32>, vector<8x64xf32> -> vector<8x64xf32>
    %7 = arith.addf %3, %6 : vector<8x64xf32>
    %c0_6 = arith.constant 0 : index
    %c0_7 = arith.constant 0 : index
    %8 = vector.load %arg7[%c0_6, %c0_7] : memref<8x64xf32, #tpu.memory_space<vmem>>, vector<8x64xf32>
    tpu.vector_store %arg7[%c0_6, %c0_7], %7 {strides = array<i32>} : memref<8x64xf32, #tpu.memory_space<vmem>>, vector<8x64xf32>,
    %c0_i32_8 = arith.constant 0 : i32
    %9 = arith.cmpi eq, %arg2, %c0_i32_8 : i32
    %10 = arith.extui %9 : i1 to i32
    %c0_i32_9 = arith.constant 0 : i32
    %11 = arith.cmpi ne, %10, %c0_i32_9 : i32
    scf.if %11 {
      %c0_10 = arith.constant 0 : index
      %c0_11 = arith.constant 0 : index
      %12 = vector.load %arg7[%c0_10, %c0_11] : memref<8x64xf32, #tpu.memory_space<vmem>>, vector<8x64xf32>
      %c0_12 = arith.constant 0 : index
      %c0_13 = arith.constant 0 : index
      %13 = vector.load %arg5[%c0_12, %c0_13] : memref<1x64xf32, #tpu.memory_space<vmem>>, vector<1x64xf32>
      %14 = vector.broadcast %13 : vector<1x64xf32> to vector<8x64xf32>
      %15 = arith.addf %12, %14 : vector<8x64xf32>
      %c0_14 = arith.constant 0 : index
      %c0_15 = arith.constant 0 : index
      %16 = vector.load %arg6[%c0_14, %c0_15] : memref<8x64xf32, #tpu.memory_space<vmem>>, vector<8x64xf32>
      tpu.vector_store %arg6[%c0_14, %c0_15], %15 {strides = array<i32>} : memref<8x64xf32, #tpu.memory_space<vmem>>, vector<8x64xf32>,
    } else {
    }
    return
  }
  func.func @transform_0(%arg0: i32, %arg1: i32, %arg2: i32) -> (i32, i32) {
    %c0_i32 = arith.constant 0 : i32
    return %arg0, %arg2 : i32, i32
  }
  func.func @transform_1(%arg0: i32, %arg1: i32, %arg2: i32) -> (i32, i32) {
    %c0_i32 = arith.constant 0 : i32
    return %arg2, %arg1 : i32, i32
  }
  func.func @transform_2(%arg0: i32, %arg1: i32, %arg2: i32) -> (i32, i32) {
    %c0_i32 = arith.constant 0 : i32
    %c0_i32_0 = arith.constant 0 : i32
    return %c0_i32, %arg1 : i32, i32
  }
  func.func @transform_3(%arg0: i32, %arg1: i32, %arg2: i32) -> (i32, i32) {
    %c0_i32 = arith.constant 0 : i32
    return %arg0, %arg1 : i32, i32
  }
}

</mosaic_0001>

<llo_original>
// kernel: tpu_custom_call.1
$region0: #{tpu_custom_call.1}
  #allocation0 [shape = 'u32[]', space=smem, size = 0x4, offset = 0x4, fixed_abs, tag = 'smem constant byte address 0x4 - core index']
  #allocation1 [shape = 'u32[72,128]{1,0:T(1,128)}', space=vmem, size = 0x9000, scoped, tag = 'internal scratch']
  #allocation2 [shape = 'f32[8,64]{1,0:T(8,128)}', space=vmem, size = 0x1000, scoped, tag = 'scratch operand']
  %s0 = inlined_call_operand.hbm [shape: f32[8,32], index: 0, kind: input, shape index: {}]
  %s1 = inlined_call_operand.hbm [shape: f32[32,64], index: 1, kind: input, shape index: {}]
  %s2 = inlined_call_operand.vmem [shape: f32[1,64], index: 2, kind: input, shape index: {}]
  %s3 = inlined_call_operand.hbm [shape: f32[8,64], index: 3, kind: output, shape index: {}]
  %s4 = sld [smem:[#allocation0]]
  $region38: #{tpu_custom_call.1} parent=0
    _
  %s6 = ssub.s32 1, %s4
  %s7 = scalar_select 0, %s6, %s4
  $region1: #{tpu_custom_call.1} parent=0
    #allocation3 [shape = 'u8[4096]{0}', space=vmem, size = 0x1000, scoped, tag = 'input window, operand 0, single buffered']
    #allocation4 [shape = 's32[1]{0}', space=sflag, size = 0x4, scoped, tag = 'scoped memory for tpu_custom_call.1']
    #allocation5 [shape = 's32[1]{0}', space=sflag, size = 0x4, scoped, tag = 'scoped memory for tpu_custom_call.1']
    #allocation6 [shape = 'u8[16384]{0}', space=vmem, size = 0x4000, scoped, tag = 'input window, operand 1, single buffered']
    #allocation7 [shape = 's32[1]{0}', space=sflag, size = 0x4, scoped, tag = 'scoped memory for tpu_custom_call.1']
    #allocation8 [shape = 'u8[4096]{0}', space=vmem, size = 0x1000, scoped, tag = 'output window, operand 0, single buffered']
    %8 = vsyncpa [#allocation4], 0
    %9 = vsyncpa [#allocation7], 0
    %10 = vsyncpa [#allocation5], 0
    // Predicated region
    $region2: #{tpu_custom_call.1} parent=1 // pred_check
      _
    $region3: #{tpu_custom_call.1} parent=1 // pred_check_branch
      %12 = sbr.rel (0) target = $region5
    $region4: #{tpu_custom_call.1} parent=1 // pred_region
      %14 = vsyncadd [#allocation4], 0
      %s16 = sshll.u32 %s0, 4
      %s17 = int_to_ptr.hbm [resolvable:$true] %s16
      %s18 = sshll.u32 [#allocation3], 4
      %s19 = int_to_ptr.vmem [resolvable:$true] %s18
      %21 = dma.hbm_to_vmem [thread:$0]  %s17, 128, %s19, [#allocation4]
    $region5: #{tpu_custom_call.1} parent=1 // pred_fallthru
      _
    // Predicated region
    $region6: #{tpu_custom_call.1} parent=1 // pred_check
      _
    $region7: #{tpu_custom_call.1} parent=1 // pred_check_branch
      %23 = sbr.rel (0) target = $region9
    $region8: #{tpu_custom_call.1} parent=1 // pred_region
      %25 = vsyncadd [#allocation7], 0
      %s26 = sshll.u32 %s1, 4
      %s27 = int_to_ptr.hbm [resolvable:$true] %s26
      %s28 = sshll.u32 [#allocation6], 4
      %s29 = int_to_ptr.vmem [resolvable:$true] %s28
      %34 = dma.hbm_to_vmem [thread:$0]  %s27, 512, %s29, [#allocation7], 128, 128, 8
    $region9: #{tpu_custom_call.1} parent=1 // pred_fallthru
      _
    // Predicated region
    $region10: #{tpu_custom_call.1} parent=1 // pred_check
      _
    $region11: #{tpu_custom_call.1} parent=1 // pred_check_branch
      %36 = sbr.rel (0) target = $region13
    $region12: #{tpu_custom_call.1} parent=1 // pred_region
      _
    $region13: #{tpu_custom_call.1} parent=1 // pred_fallthru
      _
    // Predicated region
    $region14: #{tpu_custom_call.1} parent=1 // pred_check
      _
    $region15: #{tpu_custom_call.1} parent=1 // pred_check_branch
      %38 = sbr.rel (0) target = $region17
    $region16: #{tpu_custom_call.1} parent=1 // pred_region
      %40 = dma.done [#allocation4], 128
    $region17: #{tpu_custom_call.1} parent=1 // pred_fallthru
      _
    // Predicated region
    $region18: #{tpu_custom_call.1} parent=1 // pred_check
      _
    $region19: #{tpu_custom_call.1} parent=1 // pred_check_branch
      %42 = sbr.rel (0) target = $region21
    $region20: #{tpu_custom_call.1} parent=1 // pred_region
      %44 = dma.done [#allocation7], 512
    $region21: #{tpu_custom_call.1} parent=1 // pred_fallthru
      _
    %p45 = scmp.eq.s32.totalorder 0, 0
    // Predicated region
    $region22: #{tpu_custom_call.1} parent=1 // pred_check
      %p46 = pneg %p45
    $region23: #{tpu_custom_call.1} parent=1 // pred_check_branch
      %48 = sbr.rel (%p46) target = $region25
    $region24: #{tpu_custom_call.1} parent=1 // pred_region
      %vm49 = vcmask 523264
      %50 = vst.msk [vmem:[#allocation2] sm:$0xff] %vm49, 0.0
    $region25: #{tpu_custom_call.1} parent=1 // pred_fallthru
      _
    %v51 = vld [vmem:[#allocation2] sm:$0xff]
    %v52 = vld [vmem:[#allocation3] sm:$0xff]
    %v53 = vld [vmem:[#allocation6] sm:$0xff]
    %v54 = vld [vmem:[#allocation6 + $0x8] sm:$0xff]
    %v55 = vld [vmem:[#allocation6 + $0x10] sm:$0xff]
    %v56 = vld [vmem:[#allocation6 + $0x18] sm:$0xff]
    %vm57 = vcmask 261120
    %v59 = vsel %vm57, %v52, 0
    %61 = vmatpush.msra.mxu0 0.0
    %62 = vmatpush.msra.mxu0 0.0
    %63 = vmatpush.msra.mxu0 0.0
    %64 = vmatpush.msra.mxu0 0.0
    %65 = vmatpush.msra.mxu0 0.0
    %66 = vmatpush.msra.mxu0 0.0
    %67 = vmatpush.msra.mxu0 0.0
    %68 = vmatpush.msra.mxu0 0.0
    %69 = vmatpush.msra.mxu0 0.0
    %70 = vmatpush.msra.mxu0 0.0
    %71 = vmatpush.msra.mxu0 0.0
    %72 = vmatpush.msra.mxu0 0.0
    %73 = vmatpush.msra.mxu0 %v56
    %74 = vmatpush.msra.mxu0 %v55
    %75 = vmatpush.msra.mxu0 %v54
    %76 = vmatpush.msra.mxu0 %v53
    %77 = vmatmul.f32.gmra.mxu0 %v59
    %v78 = vpop.f32.mrf.mxu0
    %v79 = vadd.f32 0.0, %v78
    %80 = vdwg.mxu0
    %v81 = vadd.f32 %v51, %v79
    %vm82 = vcmask 523264
    %83 = vst.msk [vmem:[#allocation2] sm:$0xff] %vm82, %v81
    // Predicated region
    $region26: #{tpu_custom_call.1} parent=1 // pred_check
      %p84 = pneg %p45
    $region27: #{tpu_custom_call.1} parent=1 // pred_check_branch
      %86 = sbr.rel (%p84) target = $region29
    $region28: #{tpu_custom_call.1} parent=1 // pred_region
      %v87 = vld [vmem:[#allocation2] sm:$0xff]
      %v88 = vld [vmem:[%s2] sm:$0x1]
      %v90 = vperm.slane %v88, 0
      %v92 = vadd.f32 %v87, %v90
      %93 = vst.msk [vmem:[#allocation8] sm:$0xff] %vm82, %v92
    $region29: #{tpu_custom_call.1} parent=1 // pred_fallthru
      _
    // Predicated region
    $region30: #{tpu_custom_call.1} parent=1 // pred_check
      _
    $region31: #{tpu_custom_call.1} parent=1 // pred_check_branch
      %95 = sbr.rel (0) target = $region33
    $region32: #{tpu_custom_call.1} parent=1 // pred_region
      %97 = vsyncadd [#allocation5], 0
      %s99 = sshll.u32 [#allocation8], 4
      %s100 = int_to_ptr.vmem [resolvable:$true] %s99
      %s101 = sshll.u32 %s3, 4
      %s102 = int_to_ptr.hbm [resolvable:$true] %s101
      %104 = dma.vmem_to_hbm [thread:$0]  %s100, 128, %s102, [#allocation5]
    $region33: #{tpu_custom_call.1} parent=1 // pred_fallthru
      _
    // Predicated region
    $region34: #{tpu_custom_call.1} parent=1 // pred_check
      _
    $region35: #{tpu_custom_call.1} parent=1 // pred_check_branch
      %106 = sbr.rel (0) target = $region37
    $region36: #{tpu_custom_call.1} parent=1 // pred_region
      %108 = dma.done [#allocation5], 128
    $region37: #{tpu_custom_call.1} parent=1 // pred_fallthru
      _
    %109 = vsyncpa [#allocation4], 1
    %110 = vsyncpa [#allocation7], 1
    %111 = vsyncpa [#allocation5], 1

</llo_original>
